<compile_context>
chip_gen: v7x
topology: tpu7x:2x2x1
jax: 0.10.0
libtpu: 0.0.40
codegen_flags: <defaults>
</compile_context>

<pallas_src>
import functools

import jax
import jax.numpy as jnp
from jax.experimental import pallas as pl
from jax.experimental.pallas import tpu as pltpu

LANE = 128


def _round_up(v, m):
    return (v + m - 1) // m * m


def _pad2d(x, rows, cols):
    r, c = x.shape
    return jnp.pad(x, ((0, rows - r), (0, cols - c)))


def _vmem_budget_bytes():
    """Generation-aware scoped-VMEM budget (v7x: 64 MiB physical per TC)."""
    cap = 64 * 1024 * 1024  # conservative default
    try:
        info = pltpu.get_tpu_info()
        cap = int(getattr(info, "vmem_capacity_bytes", cap))
    except Exception:
        pass
    return min(cap // 2, 48 * 1024 * 1024)  # 32 MiB on v7x, 48 MiB on v5e/v6e


def _pick_tile(n_pad, target, cap=None):
    """Largest multiple of LANE that divides n_pad and is <= min(target, cap)."""
    limit = target if cap is None else min(target, cap)
    limit = max(limit, LANE)
    best = LANE
    t = LANE
    while t <= limit:
        if n_pad % t == 0:
            best = t
        t += LANE
    return best


# ---------------------------------------------------------------------------
# Path 1: fully fused network (small graphs -- whole problem lives in VMEM).
# ---------------------------------------------------------------------------
def _gcn_fused_kernel(adj_ref, x_ref, w_ref, b_ref, o_ref, *, num_layers):
    # adj_ref: (Np, Np) bf16 (0/1 -> exact), fed to the MXU as bf16 directly.
    # x_ref:   (Np, Cp) f32
    # w_ref:   (L, Cp, Cp) f32 stacked W^T      b_ref: (L, 1, Cp) f32
    # o_ref:   (Np, Cp) f32
    a = adj_ref[...]                       # bf16, no upcast copy
    h = x_ref[...]                         # f32
    for layer in range(num_layers):        # static unroll (num_layers is small)
        z = jnp.dot(h, w_ref[layer], preferred_element_type=jnp.float32)
        h = (jnp.dot(a, z.astype(jnp.bfloat16),           # bf16 x bf16 MXU
                     preferred_element_type=jnp.float32)
             + b_ref[layer])
        if layer != num_layers - 1:
            h = jnp.maximum(h, 0.0)
        # dropout: identity in eval mode
    o_ref[...] = h


def gcn_forward_fused(x, adj, params):
    n, c_in = x.shape
    num_layers = len(params)
    c_out = params[-1][0].shape[1]

    cp = _round_up(max([c_in] + [w.shape[1] for w, _ in params]), LANE)
    n_pad = _round_up(n, LANE)
    vmem_limit = _vmem_budget_bytes()

    x_p = _pad2d(x.astype(jnp.float32), n_pad, cp)
    adj_p = _pad2d(adj, n_pad, n_pad).astype(jnp.bfloat16)   # 0/1 exact in bf16
    w_stack = jnp.stack([_pad2d(w.astype(jnp.float32), cp, cp) for w, _ in params])
    b_stack = jnp.stack(
        [_pad2d(b.reshape(1, -1).astype(jnp.float32), 1, cp) for _, b in params]
    )

    kernel = functools.partial(_gcn_fused_kernel, num_layers=num_layers)
    out_p = pl.pallas_call(
        kernel,
        out_shape=jax.ShapeDtypeStruct((n_pad, cp), jnp.float32),
        grid=(1,),  # single step: the whole problem is one VMEM-resident tile
        in_specs=[
            pl.BlockSpec((n_pad, n_pad), lambda i: (0, 0)),           # adj bf16
            pl.BlockSpec((n_pad, cp), lambda i: (0, 0)),              # X
            pl.BlockSpec((num_layers, cp, cp), lambda i: (0, 0, 0)),  # W^T stack
            pl.BlockSpec((num_layers, 1, cp), lambda i: (0, 0, 0)),   # bias stack
        ],
        out_specs=pl.BlockSpec((n_pad, cp), lambda i: (0, 0)),
        compiler_params=pltpu.CompilerParams(
            dimension_semantics=("arbitrary",),
            vmem_limit_bytes=vmem_limit,
        ),
    )(adj_p, x_p, w_stack, b_stack)
    return out_p[:n, :c_out]


# ---------------------------------------------------------------------------
# Path 2: tiled aggregation for larger graphs.
#   Z = X @ W^T is precomputed outside the kernel (plain XLA matmul) and
#   emitted in bf16; the kernel only does out = adj @ Z + b over a
#   (row-parallel x k-reduction) grid, accumulating straight into the
#   resident f32 output block.
# ---------------------------------------------------------------------------
def _agg_kernel(a_ref, z_ref, b_ref, o_ref, *, apply_relu, tile_k, z_resident):
    # a_ref: (Tr, Tk) int8 adjacency tile (0/1)
    # z_ref: (Np, Cp) bf16 (resident) or (Tk, Cp) bf16 (streamed)
    # b_ref: (1, Cp) f32
    # o_ref: (Tr, Cp) f32 -- resident across the k axis (index map ignores k)
    k = pl.program_id(1)

    # int8 -> f32 -> bf16 widen (guaranteed lowering path); cast ops ride
    # otherwise-idle VALU slots on this HBM-bound kernel.
    a = a_ref[...].astype(jnp.float32).astype(jnp.bfloat16)

    if z_resident:
        start = pl.multiple_of(k * tile_k, tile_k)
        z = z_ref[pl.ds(start, tile_k), :]
    else:
        z = z_ref[...]

    part = jnp.dot(a, z, preferred_element_type=jnp.float32)  # bf16 x bf16 MXU

    @pl.when(k == 0)
    def _():
        o_ref[...] = part

    @pl.when(k > 0)
    def _():
        o_ref[...] = o_ref[...] + part

    @pl.when(k == pl.num_programs(1) - 1)
    def _():
        out = o_ref[...] + b_ref[...]     # bias added once per row tile
        if apply_relu:
            out = jnp.maximum(out, 0.0)
        o_ref[...] = out


def _gcn_aggregate_tiled(z_bf16, adj_i8, b_pad, *, apply_relu, tile_r, tile_k,
                         z_resident, vmem_limit):
    n_pad = adj_i8.shape[0]
    cp = z_bf16.shape[1]
    grid = (n_pad // tile_r, n_pad // tile_k)

    adj_map = lambda i, k: (i, k)
    try:
        # Deeper pipelining on the dominant HBM stream.
        adj_spec = pl.BlockSpec((tile_r, tile_k), adj_map,
                                pipeline_mode=pl.Buffered(3))
    except (TypeError, AttributeError):
        adj_spec = pl.BlockSpec((tile_r, tile_k), adj_map)

    if z_resident:
        # Whole Z stays in VMEM; never re-streamed per row tile.
        z_spec = pl.BlockSpec((n_pad, cp), lambda i, k: (0, 0))
    else:
        z_spec = pl.BlockSpec((tile_k, cp), lambda i, k: (k, 0))

    kernel = functools.partial(_agg_kernel, apply_relu=apply_relu,
                               tile_k=tile_k, z_resident=z_resident)
    return pl.pallas_call(
        kernel,
        out_shape=jax.ShapeDtypeStruct((n_pad, cp), jnp.float32),
        grid_spec=pltpu.PrefetchScalarGridSpec(
            num_scalar_prefetch=0,
            grid=grid,
            in_specs=[
                adj_spec,                                   # adj tile (int8)
                z_spec,                                     # Z (bf16)
                pl.BlockSpec((1, cp), lambda i, k: (0, 0)), # bias
            ],
            # Output block resident across k: accumulate directly into it.
            out_specs=pl.BlockSpec((tile_r, cp), lambda i, k: (i, 0)),
        ),
        compiler_params=pltpu.CompilerParams(
            dimension_semantics=("parallel", "arbitrary"),
            vmem_limit_bytes=vmem_limit,
        ),
    )(adj_i8, z_bf16, b_pad)


def gcn_forward_tiled(x, adj, params, *, row_tile_target=512, k_tile_target=1024):
    n, c_in = x.shape
    num_layers = len(params)
    c_out = params[-1][0].shape[1]
    cp = _round_up(max([c_in] + [w.shape[1] for w, _ in params]), LANE)

    # Pad N only to the 128-lane quantum; tiles are chosen to divide n_pad,
    # so no N^2 work is wasted on tile-alignment padding.
    n_pad = _round_up(n, LANE)
    # >= 2 row tiles whenever possible so the "parallel" row axis can shard
    # across both TensorCores on v7x.
    tile_r = _pick_tile(n_pad, row_tile_target, cap=max(LANE, n_pad // 2))
    tile_k = _pick_tile(n_pad, k_tile_target)

    vmem_limit = _vmem_budget_bytes()
    z_resident = n_pad * cp * 2 <= 4 * 1024 * 1024   # whole bf16 Z fits easily

    h = _pad2d(x.astype(jnp.float32), n_pad, cp)
    # 0/1 adjacency stored as int8 in HBM: halves the dominant N^2 stream.
    adj_i8 = _pad2d(adj, n_pad, n_pad).astype(jnp.int8)

    for li, (w_t, b) in enumerate(params):
        w_p = _pad2d(w_t.astype(jnp.float32), cp, cp)
        b_p = _pad2d(b.reshape(1, -1).astype(jnp.float32), 1, cp)
        # Feature transform hoisted out of the aggregation kernel (cheap,
        # O(N*C^2)); emitted as bf16 so the aggregation matmul is bf16 x bf16
        # and Z's HBM traffic is halved.
        z = jnp.dot(h, w_p, preferred_element_type=jnp.float32).astype(jnp.bfloat16)
        h = _gcn_aggregate_tiled(
            z, adj_i8, b_p,
            apply_relu=(li != num_layers - 1),
            tile_r=tile_r, tile_k=tile_k,
            z_resident=z_resident, vmem_limit=vmem_limit,
        )
        # dropout: identity in eval mode
    return h[:n, :c_out]


# ---------------------------------------------------------------------------
# Dispatcher + params
# ---------------------------------------------------------------------------
def gcn_forward(x, adj, params, *, mode="auto"):
    if mode == "auto":
        n = x.shape[0]
        n_pad = _round_up(n, LANE)
        cp = _round_up(max([x.shape[1]] + [w.shape[1] for w, _ in params]), LANE)
        num_layers = len(params)
        fused_bytes = (
            n_pad * n_pad * 2                         # bf16 adj
            + 2 * n_pad * cp * 4                      # X / out
            + num_layers * (cp * cp + cp) * 4         # weights + bias
        )
        # /3: headroom for pipelining buffers + in-kernel temporaries, so the
        # fused path stays safe on v7x (64 MiB physical VMEM).
        mode = "fused" if fused_bytes <= _vmem_budget_bytes() // 3 else "tiled"
    if mode == "fused":
        return gcn_forward_fused(x, adj, params)
    return gcn_forward_tiled(x, adj, params)


def init_gcn_params(key, in_channels, hidden_channels, out_channels, num_layers):
    """Glorot-style init, PyG GCNConv shapes: W is (out, in); kernel uses W^T."""
    dims = [in_channels] + [hidden_channels] * (num_layers - 1) + [out_channels]
    params = []
    for li in range(num_layers):
        c_in, c_out = dims[li], dims[li + 1]
        key, wk, bk = jax.random.split(key, 3)
        scale = jnp.sqrt(6.0 / (c_in + c_out))
        w = jax.random.uniform(wk, (c_out, c_in), jnp.float32, -scale, scale)
        b = jax.random.uniform(bk, (c_out,), jnp.float32, -0.1, 0.1)
        params.append((w.T, b))  # (c_in, c_out), (c_out,)
    return params


def gcn_reference(x, adj, params):
    h = x
    num_layers = len(params)
    for li, (w_t, b) in enumerate(params):
        h = adj @ (h @ w_t) + b
        if li != num_layers - 1:
            h = jnp.maximum(h, 0.0)
    return h


def _assert_close(out, ref, tol=2e-2):
    # bf16 Z at the MXU gives ~0.4% per-element rounding (f32 accumulation);
    # compare scaled by the reference magnitude.
    scale = float(jnp.maximum(jnp.max(jnp.abs(ref)), 1.0))
    err = float(jnp.max(jnp.abs(out - ref))) / scale
    assert err < tol, err


if __name__ == "__main__":
    key = jax.random.PRNGKey(0)
    k1, k2, k3, k4, k5 = jax.random.split(key, 5)

    IN_CH, HID_CH, OUT_CH, NUM_LAYERS = 16, 32, 8, 3
    params = init_gcn_params(k3, IN_CH, HID_CH, OUT_CH, NUM_LAYERS)

    # ---- small graph: fully fused single-pallas_call path ----
    N = 64
    x = jax.random.normal(k1, (N, IN_CH), jnp.float32)
    adj = (jax.random.uniform(k2, (N, N), jnp.float32) < 0.1).astype(jnp.float32)

    out_fused = gcn_forward(x, adj, params, mode="fused")
    jax.block_until_ready(out_fused)
    ref = gcn_reference(x, adj, params)
    assert out_fused.shape == (N, OUT_CH)
    _assert_close(out_fused, ref)

    # ---- larger graph: tiled (row-parallel x k-reduction) path ----
    # N2 = 640 deliberately not a multiple of the tile targets: exercises the
    # "pad to 128 only, pick dividing tiles" logic.
    N2 = 640
    x2 = jax.random.normal(k4, (N2, IN_CH), jnp.float32)
    adj2 = (jax.random.uniform(k5, (N2, N2), jnp.float32) < 0.05).astype(jnp.float32)

    out_tiled = gcn_forward(x2, adj2, params, mode="tiled")
    jax.block_until_ready(out_tiled)
    ref2 = gcn_reference(x2, adj2, params)
    assert out_tiled.shape == (N2, OUT_CH)
    _assert_close(out_tiled, ref2)

    print("KERNEL_OK")
</pallas_src>

<mosaic_0001>
module attributes {stable_mosaic.version = 11 : i64} {
  func.func @_gcn_fused_kernel(%arg0: i32, %arg1: memref<128x128xbf16, #tpu.memory_space<vmem>>, %arg2: memref<128x128xf32, #tpu.memory_space<vmem>>, %arg3: memref<3x128x128xf32, #tpu.memory_space<vmem>>, %arg4: memref<3x1x128xf32, #tpu.memory_space<vmem>>, %arg5: memref<128x128xf32, #tpu.memory_space<vmem>>) attributes {dimension_semantics = [#tpu.dimension_semantics<arbitrary>], iteration_bounds = array<i64: 1>, scalar_prefetch = 0 : i64, scratch_operands = 0 : i64, tpu.core_type = #tpu.core_type<tc>, window_params = [{pipeline_mode = #tpu.pipeline_mode<synchronous>, transform_indices = @transform_0, window_bounds = array<i64: 128, 128>}, {pipeline_mode = #tpu.pipeline_mode<synchronous>, transform_indices = @transform_1, window_bounds = array<i64: 128, 128>}, {pipeline_mode = #tpu.pipeline_mode<synchronous>, transform_indices = @transform_2, window_bounds = array<i64: 3, 128, 128>}, {pipeline_mode = #tpu.pipeline_mode<synchronous>, transform_indices = @transform_3, window_bounds = array<i64: 3, 1, 128>}, {pipeline_mode = #tpu.pipeline_mode<synchronous>, transform_indices = @transform_4, window_bounds = array<i64: 128, 128>}]} {
    %c0 = arith.constant 0 : index
    %c0_0 = arith.constant 0 : index
    %0 = vector.load %arg1[%c0, %c0_0] : memref<128x128xbf16, #tpu.memory_space<vmem>>, vector<128x128xbf16>
    %c0_1 = arith.constant 0 : index
    %c0_2 = arith.constant 0 : index
    %1 = vector.load %arg2[%c0_1, %c0_2] : memref<128x128xf32, #tpu.memory_space<vmem>>, vector<128x128xf32>
    %c0_3 = arith.constant 0 : index
    %c0_4 = arith.constant 0 : index
    %c0_5 = arith.constant 0 : index
    %2 = vector.load %arg3[%c0_3, %c0_4, %c0_5] : memref<3x128x128xf32, #tpu.memory_space<vmem>>, vector<1x128x128xf32>
    %3 = vector.shape_cast %2 : vector<1x128x128xf32> to vector<128x128xf32>
    %cst = arith.constant dense<0.000000e+00> : vector<128x128xf32>
    %4 = tpu.matmul %1, %3, %cst {dimension_numbers = #tpu.dot_dimension_numbers<[1], [0], [0], [1], [0, 0, 1, 1], [], []>} : vector<128x128xf32>, vector<128x128xf32>, vector<128x128xf32> -> vector<128x128xf32>
    %5 = arith.truncf %4 : vector<128x128xf32> to vector<128x128xbf16>
    %cst_6 = arith.constant dense<0.000000e+00> : vector<128x128xf32>
    %6 = tpu.matmul %0, %5, %cst_6 {dimension_numbers = #tpu.dot_dimension_numbers<[1], [0], [0], [1], [0, 0, 1, 1], [], []>} : vector<128x128xbf16>, vector<128x128xbf16>, vector<128x128xf32> -> vector<128x128xf32>
    %c0_7 = arith.constant 0 : index
    %c0_8 = arith.constant 0 : index
    %c0_9 = arith.constant 0 : index
    %7 = vector.load %arg4[%c0_7, %c0_8, %c0_9] : memref<3x1x128xf32, #tpu.memory_space<vmem>>, vector<1x1x128xf32>
    %8 = vector.shape_cast %7 : vector<1x1x128xf32> to vector<1x128xf32>
    %9 = vector.broadcast %8 : vector<1x128xf32> to vector<128x128xf32>
    %10 = arith.addf %6, %9 : vector<128x128xf32>
    %cst_10 = arith.constant 0.000000e+00 : f32
    %11 = vector.broadcast %cst_10 : f32 to vector<128x128xf32>
    %12 = arith.maximumf %10, %11 : vector<128x128xf32>
    %c1 = arith.constant 1 : index
    %c0_11 = arith.constant 0 : index
    %c0_12 = arith.constant 0 : index
    %13 = vector.load %arg3[%c1, %c0_11, %c0_12] : memref<3x128x128xf32, #tpu.memory_space<vmem>>, vector<1x128x128xf32>
    %14 = vector.shape_cast %13 : vector<1x128x128xf32> to vector<128x128xf32>
    %cst_13 = arith.constant dense<0.000000e+00> : vector<128x128xf32>
    %15 = tpu.matmul %12, %14, %cst_13 {dimension_numbers = #tpu.dot_dimension_numbers<[1], [0], [0], [1], [0, 0, 1, 1], [], []>} : vector<128x128xf32>, vector<128x128xf32>, vector<128x128xf32> -> vector<128x128xf32>
    %16 = arith.truncf %15 : vector<128x128xf32> to vector<128x128xbf16>
    %cst_14 = arith.constant dense<0.000000e+00> : vector<128x128xf32>
    %17 = tpu.matmul %0, %16, %cst_14 {dimension_numbers = #tpu.dot_dimension_numbers<[1], [0], [0], [1], [0, 0, 1, 1], [], []>} : vector<128x128xbf16>, vector<128x128xbf16>, vector<128x128xf32> -> vector<128x128xf32>
    %c1_15 = arith.constant 1 : index
    %c0_16 = arith.constant 0 : index
    %c0_17 = arith.constant 0 : index
    %18 = vector.load %arg4[%c1_15, %c0_16, %c0_17] : memref<3x1x128xf32, #tpu.memory_space<vmem>>, vector<1x1x128xf32>
    %19 = vector.shape_cast %18 : vector<1x1x128xf32> to vector<1x128xf32>
    %20 = vector.broadcast %19 : vector<1x128xf32> to vector<128x128xf32>
    %21 = arith.addf %17, %20 : vector<128x128xf32>
    %cst_18 = arith.constant 0.000000e+00 : f32
    %22 = vector.broadcast %cst_18 : f32 to vector<128x128xf32>
    %23 = arith.maximumf %21, %22 : vector<128x128xf32>
    %c2 = arith.constant 2 : index
    %c0_19 = arith.constant 0 : index
    %c0_20 = arith.constant 0 : index
    %24 = vector.load %arg3[%c2, %c0_19, %c0_20] : memref<3x128x128xf32, #tpu.memory_space<vmem>>, vector<1x128x128xf32>
    %25 = vector.shape_cast %24 : vector<1x128x128xf32> to vector<128x128xf32>
    %cst_21 = arith.constant dense<0.000000e+00> : vector<128x128xf32>
    %26 = tpu.matmul %23, %25, %cst_21 {dimension_numbers = #tpu.dot_dimension_numbers<[1], [0], [0], [1], [0, 0, 1, 1], [], []>} : vector<128x128xf32>, vector<128x128xf32>, vector<128x128xf32> -> vector<128x128xf32>
    %27 = arith.truncf %26 : vector<128x128xf32> to vector<128x128xbf16>
    %cst_22 = arith.constant dense<0.000000e+00> : vector<128x128xf32>
    %28 = tpu.matmul %0, %27, %cst_22 {dimension_numbers = #tpu.dot_dimension_numbers<[1], [0], [0], [1], [0, 0, 1, 1], [], []>} : vector<128x128xbf16>, vector<128x128xbf16>, vector<128x128xf32> -> vector<128x128xf32>
    %c2_23 = arith.constant 2 : index
    %c0_24 = arith.constant 0 : index
    %c0_25 = arith.constant 0 : index
    %29 = vector.load %arg4[%c2_23, %c0_24, %c0_25] : memref<3x1x128xf32, #tpu.memory_space<vmem>>, vector<1x1x128xf32>
    %30 = vector.shape_cast %29 : vector<1x1x128xf32> to vector<1x128xf32>
    %31 = vector.broadcast %30 : vector<1x128xf32> to vector<128x128xf32>
    %32 = arith.addf %28, %31 : vector<128x128xf32>
    %c0_26 = arith.constant 0 : index
    %c0_27 = arith.constant 0 : index
    %33 = vector.load %arg5[%c0_26, %c0_27] : memref<128x128xf32, #tpu.memory_space<vmem>>, vector<128x128xf32>
    tpu.vector_store %arg5[%c0_26, %c0_27], %32 {strides = array<i32>} : memref<128x128xf32, #tpu.memory_space<vmem>>, vector<128x128xf32>,
    return
  }
  func.func @transform_0(%arg0: i32) -> (i32, i32) {
    %c0_i32 = arith.constant 0 : i32
    %c0_i32_0 = arith.constant 0 : i32
    %c0_i32_1 = arith.constant 0 : i32
    return %c0_i32, %c0_i32_0 : i32, i32
  }
  func.func @transform_1(%arg0: i32) -> (i32, i32) {
    %c0_i32 = arith.constant 0 : i32
    %c0_i32_0 = arith.constant 0 : i32
    %c0_i32_1 = arith.constant 0 : i32
    return %c0_i32, %c0_i32_0 : i32, i32
  }
  func.func @transform_2(%arg0: i32) -> (i32, i32, i32) {
    %c0_i32 = arith.constant 0 : i32
    %c0_i32_0 = arith.constant 0 : i32
    %c0_i32_1 = arith.constant 0 : i32
    %c0_i32_2 = arith.constant 0 : i32
    return %c0_i32, %c0_i32_0, %c0_i32_1 : i32, i32, i32
  }
  func.func @transform_3(%arg0: i32) -> (i32, i32, i32) {
    %c0_i32 = arith.constant 0 : i32
    %c0_i32_0 = arith.constant 0 : i32
    %c0_i32_1 = arith.constant 0 : i32
    %c0_i32_2 = arith.constant 0 : i32
    return %c0_i32, %c0_i32_0, %c0_i32_1 : i32, i32, i32
  }
  func.func @transform_4(%arg0: i32) -> (i32, i32) {
    %c0_i32 = arith.constant 0 : i32
    %c0_i32_0 = arith.constant 0 : i32
    %c0_i32_1 = arith.constant 0 : i32
    return %c0_i32, %c0_i32_0 : i32, i32
  }
}

</mosaic_0001>

<llo_original>
// kernel: tpu_custom_call.1
$region0: #{tpu_custom_call.1}
  #allocation0 [shape = 'u32[]', space=smem, size = 0x4, offset = 0x4, fixed_abs, tag = 'smem constant byte address 0x4 - core index']
  #allocation1 [shape = 'u32[144,128]{1,0:T(1,128)}', space=vmem, size = 0x12000, scoped, tag = 'internal scratch']
  %s0 = inlined_call_operand.hbm [shape: bf16[128,128], index: 0, kind: input, shape index: {}]
  %s1 = inlined_call_operand.hbm [shape: f32[128,128], index: 1, kind: input, shape index: {}]
  %s2 = inlined_call_operand.hbm [shape: f32[3,128,128], index: 2, kind: input, shape index: {}]
  %s3 = inlined_call_operand.vmem [shape: f32[3,1,128], index: 3, kind: input, shape index: {}]
  %s4 = inlined_call_operand.hbm [shape: f32[128,128], index: 4, kind: output, shape index: {}]
  %s5 = sld [smem:[#allocation0]]
  $region38: #{tpu_custom_call.1} parent=0
    _
  %s7 = ssub.s32 1, %s5
  %s8 = scalar_select 0, %s7, %s5
  $region1: #{tpu_custom_call.1} parent=0
    #allocation2 [shape = 'u8[32768]{0}', space=vmem, size = 0x8000, scoped, tag = 'input window, operand 0, single buffered']
    #allocation3 [shape = 's32[1]{0}', space=sflag, size = 0x4, scoped, tag = 'scoped memory for tpu_custom_call.1']
    #allocation4 [shape = 's32[1]{0}', space=sflag, size = 0x4, scoped, tag = 'scoped memory for tpu_custom_call.1']
    #allocation5 [shape = 'u8[65536]{0}', space=vmem, size = 0x10000, scoped, tag = 'input window, operand 1, single buffered']
    #allocation6 [shape = 's32[1]{0}', space=sflag, size = 0x4, scoped, tag = 'scoped memory for tpu_custom_call.1']
    #allocation7 [shape = 'u8[196608]{0}', space=vmem, size = 0x30000, scoped, tag = 'input window, operand 2, single buffered']
    #allocation8 [shape = 'u8[65536]{0}', space=vmem, size = 0x10000, scoped, tag = 'output window, operand 0, single buffered']
    %9 = vsyncpa [#allocation3], 0
    %10 = vsyncpa [#allocation6], 0
    %11 = vsyncpa [#allocation4], 0
    // Predicated region
    $region2: #{tpu_custom_call.1} parent=1 // pred_check
      _
    $region3: #{tpu_custom_call.1} parent=1 // pred_check_branch
      %13 = sbr.rel (0) target = $region5
    $region4: #{tpu_custom_call.1} parent=1 // pred_region
      %s15 = ssub.s32 1024, 1024
      %16 = vsyncadd [#allocation3], %s15
      %s17 = sshll.u32 [#allocation2], 4
      %s18 = int_to_ptr.vmem [resolvable:$true] %s17
      %23 = dma.hbm_to_vmem [thread:$0]  %s0, 1024, %s18, [#allocation3], 64, 64, 4
    $region5: #{tpu_custom_call.1} parent=1 // pred_fallthru
      _
    // Predicated region
    $region6: #{tpu_custom_call.1} parent=1 // pred_check
      _
    $region7: #{tpu_custom_call.1} parent=1 // pred_check_branch
      %25 = sbr.rel (0) target = $region9
    $region8: #{tpu_custom_call.1} parent=1 // pred_region
      %s27 = ssub.s32 2048, 2048
      %28 = vsyncadd [#allocation6], %s27
      %s29 = sshll.u32 [#allocation5], 4
      %s30 = int_to_ptr.vmem [resolvable:$true] %s29
      %35 = dma.hbm_to_vmem [thread:$0]  %s1, 2048, %s30, [#allocation6], 128, 128, 8
    $region9: #{tpu_custom_call.1} parent=1 // pred_fallthru
      _
    // Predicated region
    $region10: #{tpu_custom_call.1} parent=1 // pred_check
      _
    $region11: #{tpu_custom_call.1} parent=1 // pred_check_branch
      %37 = sbr.rel (0) target = $region13
    $region12: #{tpu_custom_call.1} parent=1 // pred_region
      %s39 = ssub.s32 6144, 6144
      %40 = vsyncadd [#allocation6], %s39
      %s41 = sshll.u32 [#allocation7], 4
      %s42 = int_to_ptr.vmem [resolvable:$true] %s41
      %47 = dma.hbm_to_vmem [thread:$0]  %s2, 6144, %s42, [#allocation6], 128, 128, 8
    $region13: #{tpu_custom_call.1} parent=1 // pred_fallthru
      _
    // Predicated region
    $region14: #{tpu_custom_call.1} parent=1 // pred_check
      _
    $region15: #{tpu_custom_call.1} parent=1 // pred_check_branch
      %49 = sbr.rel (0) target = $region17
    $region16: #{tpu_custom_call.1} parent=1 // pred_region
      _
    $region17: #{tpu_custom_call.1} parent=1 // pred_fallthru
      _
    // Predicated region
    $region18: #{tpu_custom_call.1} parent=1 // pred_check
      _
    $region19: #{tpu_custom_call.1} parent=1 // pred_check_branch
      %51 = sbr.rel (0) target = $region21
    $region20: #{tpu_custom_call.1} parent=1 // pred_region
      %52 = dma.done [#allocation3], 1024
    $region21: #{tpu_custom_call.1} parent=1 // pred_fallthru
      _
    // Predicated region
    $region22: #{tpu_custom_call.1} parent=1 // pred_check
      _
    $region23: #{tpu_custom_call.1} parent=1 // pred_check_branch
      %54 = sbr.rel (0) target = $region25
    $region24: #{tpu_custom_call.1} parent=1 // pred_region
      %55 = dma.done [#allocation6], 2048
    $region25: #{tpu_custom_call.1} parent=1 // pred_fallthru
      _
    // Predicated region
    $region26: #{tpu_custom_call.1} parent=1 // pred_check
      _
    $region27: #{tpu_custom_call.1} parent=1 // pred_check_branch
      %57 = sbr.rel (0) target = $region29
    $region28: #{tpu_custom_call.1} parent=1 // pred_region
      %58 = dma.done [#allocation6], 6144
    $region29: #{tpu_custom_call.1} parent=1 // pred_fallthru
      _
    %v60 = vld [vmem:[#allocation2] sm:$0xf]
    %v61 = vld [vmem:[#allocation2 + $0x4] sm:$0xf]
    %v62 = vld [vmem:[#allocation2 + $0x8] sm:$0xf]
    %v63 = vld [vmem:[#allocation2 + $0xc] sm:$0xf]
    %v64 = vld [vmem:[#allocation2 + $0x10] sm:$0xf]
    %v65 = vld [vmem:[#allocation2 + $0x14] sm:$0xf]
    %v66 = vld [vmem:[#allocation2 + $0x18] sm:$0xf]
    %v67 = vld [vmem:[#allocation2 + $0x1c] sm:$0xf]
    %v68 = vld [vmem:[#allocation2 + $0x20] sm:$0xf]
    %v69 = vld [vmem:[#allocation2 + $0x24] sm:$0xf]
    %v70 = vld [vmem:[#allocation2 + $0x28] sm:$0xf]
    %v71 = vld [vmem:[#allocation2 + $0x2c] sm:$0xf]
    %v72 = vld [vmem:[#allocation2 + $0x30] sm:$0xf]
    %v73 = vld [vmem:[#allocation2 + $0x34] sm:$0xf]
    %v74 = vld [vmem:[#allocation2 + $0x38] sm:$0xf]
    %v75 = vld [vmem:[#allocation2 + $0x3c] sm:$0xf]
    %v76 = vld [vmem:[#allocation5] sm:$0xff]
    %v77 = vld [vmem:[#allocation5 + $0x8] sm:$0xff]
    %v78 = vld [vmem:[#allocation5 + $0x10] sm:$0xff]
    %v79 = vld [vmem:[#allocation5 + $0x18] sm:$0xff]
    %v80 = vld [vmem:[#allocation5 + $0x20] sm:$0xff]
    %v81 = vld [vmem:[#allocation5 + $0x28] sm:$0xff]
    %v82 = vld [vmem:[#allocation5 + $0x30] sm:$0xff]
    %v83 = vld [vmem:[#allocation5 + $0x38] sm:$0xff]
    %v84 = vld [vmem:[#allocation5 + $0x40] sm:$0xff]
    %v85 = vld [vmem:[#allocation5 + $0x48] sm:$0xff]
    %v86 = vld [vmem:[#allocation5 + $0x50] sm:$0xff]
    %v87 = vld [vmem:[#allocation5 + $0x58] sm:$0xff]
    %v88 = vld [vmem:[#allocation5 + $0x60] sm:$0xff]
    %v89 = vld [vmem:[#allocation5 + $0x68] sm:$0xff]
    %v90 = vld [vmem:[#allocation5 + $0x70] sm:$0xff]
    %v91 = vld [vmem:[#allocation5 + $0x78] sm:$0xff]
    %v92 = vld [vmem:[#allocation7] sm:$0xff]
    %v93 = vld [vmem:[#allocation7 + $0x8] sm:$0xff]
    %v94 = vld [vmem:[#allocation7 + $0x10] sm:$0xff]
    %v95 = vld [vmem:[#allocation7 + $0x18] sm:$0xff]
    %v96 = vld [vmem:[#allocation7 + $0x20] sm:$0xff]
    %v97 = vld [vmem:[#allocation7 + $0x28] sm:$0xff]
    %v98 = vld [vmem:[#allocation7 + $0x30] sm:$0xff]
    %v99 = vld [vmem:[#allocation7 + $0x38] sm:$0xff]
    %v100 = vld [vmem:[#allocation7 + $0x40] sm:$0xff]
    %v101 = vld [vmem:[#allocation7 + $0x48] sm:$0xff]
    %v102 = vld [vmem:[#allocation7 + $0x50] sm:$0xff]
    %v103 = vld [vmem:[#allocation7 + $0x58] sm:$0xff]
    %v104 = vld [vmem:[#allocation7 + $0x60] sm:$0xff]
    %v105 = vld [vmem:[#allocation7 + $0x68] sm:$0xff]
    %v106 = vld [vmem:[#allocation7 + $0x70] sm:$0xff]
    %v107 = vld [vmem:[#allocation7 + $0x78] sm:$0xff]
    %108 = vmatprep.subr.mxu0 0.0
    %109 = vmatpush1.msra.mxu0 %v92
    %110 = vmatprep.subr.mxu0 0.0
    %111 = vmatpush1.msra.mxu0 %v93
    %112 = vmatprep.subr.mxu0 0.0
    %113 = vmatpush1.msra.mxu0 %v94
    %114 = vmatprep.subr.mxu0 0.0
    %115 = vmatpush1.msra.mxu0 %v95
    %116 = vmatprep.subr.mxu0 0.0
    %117 = vmatpush1.msra.mxu0 %v96
    %118 = vmatprep.subr.mxu0 0.0
    %119 = vmatpush1.msra.mxu0 %v97
    %120 = vmatprep.subr.mxu0 0.0
    %121 = vmatpush1.msra.mxu0 %v98
    %122 = vmatprep.subr.mxu0 0.0
    %123 = vmatpush1.msra.mxu0 %v99
    %124 = vmatprep.subr.mxu0 0.0
    %125 = vmatpush1.msra.mxu0 %v100
    %126 = vmatprep.subr.mxu0 0.0
    %127 = vmatpush1.msra.mxu0 %v101
    %128 = vmatprep.subr.mxu0 0.0
    %129 = vmatpush1.msra.mxu0 %v102
    %130 = vmatprep.subr.mxu0 0.0
    %131 = vmatpush1.msra.mxu0 %v103
    %132 = vmatprep.subr.mxu0 0.0
    %133 = vmatpush1.msra.mxu0 %v104
    %134 = vmatprep.subr.mxu0 0.0
    %135 = vmatpush1.msra.mxu0 %v105
    %136 = vmatprep.subr.mxu0 0.0
    %137 = vmatpush1.msra.mxu0 %v106
    %138 = vmatprep.subr.mxu0 0.0
    %139 = vmatpush1.msra.mxu0 %v107
    %140 = vmatprep.subr.mxu0 0.0
    %141 = vmatpush1.msra.mxu0 0.0
    %142 = vmatprep.subr.mxu0 0.0
    %143 = vmatpush1.msra.mxu0 0.0
    %144 = vmatprep.subr.mxu0 0.0
    %145 = vmatpush1.msra.mxu0 0.0
    %146 = vmatprep.subr.mxu0 0.0
    %147 = vmatpush1.msra.mxu0 0.0
    %148 = vmatprep.subr.mxu0 0.0
    %149 = vmatpush1.msra.mxu0 0.0
    %150 = vmatprep.subr.mxu0 0.0
    %151 = vmatpush1.msra.mxu0 0.0
    %152 = vmatprep.subr.mxu0 0.0
    %153 = vmatpush1.msra.mxu0 0.0
    %154 = vmatprep.subr.mxu0 0.0
    %155 = vmatpush1.msra.mxu0 0.0
    %156 = vmatprep.subr.mxu0 0.0
    %157 = vmatpush1.msra.mxu0 0.0
    %158 = vmatprep.subr.mxu0 0.0
    %159 = vmatpush1.msra.mxu0 0.0
    %160 = vmatprep.subr.mxu0 0.0
    %161 = vmatpush1.msra.mxu0 0.0
    %162 = vmatprep.subr.mxu0 0.0
    %163 = vmatpush1.msra.mxu0 0.0
    %164 = vmatprep.subr.mxu0 0.0
    %165 = vmatpush1.msra.mxu0 0.0
    %166 = vmatprep.subr.mxu0 0.0
    %167 = vmatpush1.msra.mxu0 0.0
    %168 = vmatprep.subr.mxu0 0.0
    %169 = vmatpush1.msra.mxu0 0.0
    %170 = vmatprep.subr.mxu0 0.0
    %171 = vmatpush1.msra.mxu0 0.0
    %172 = vmatprep.mubr.f32.mxu0 0.0
    %173 = vmatmul.mubr.f32.gmra.mrb[0].mxu0 %v76
    %v174 = vpop.f32.mrb[0].mxu0
    %v175 = vadd.f32 0.0, %v174
    %v176 = vpop.f32.mrb[0].mxu0
    %177 = vmatprep.mubr.f32.mxu0 0.0
    %178 = vmatmul.mubr.f32.gmra.mrb[0].mxu0 %v77
    %v179 = vpop.f32.mrb[0].mxu0
    %v180 = vadd.f32 0.0, %v179
    %v181 = vpop.f32.mrb[0].mxu0
    %182 = vmatprep.mubr.f32.mxu0 0.0
    %183 = vmatmul.mubr.f32.gmra.mrb[0].mxu0 %v78
    %v184 = vpop.f32.mrb[0].mxu0
    %v185 = vadd.f32 0.0, %v184
    %v186 = vpop.f32.mrb[0].mxu0
    %187 = vmatprep.mubr.f32.mxu0 0.0
    %188 = vmatmul.mubr.f32.gmra.mrb[0].mxu0 %v79
    %v189 = vpop.f32.mrb[0].mxu0
    %v190 = vadd.f32 0.0, %v189
    %v191 = vpop.f32.mrb[0].mxu0
    %192 = vmatprep.mubr.f32.mxu0 0.0
    %193 = vmatmul.mubr.f32.gmra.mrb[0].mxu0 %v80
    %v194 = vpop.f32.mrb[0].mxu0
    %v195 = vadd.f32 0.0, %v194
    %v196 = vpop.f32.mrb[0].mxu0
    %197 = vmatprep.mubr.f32.mxu0 0.0
    %198 = vmatmul.mubr.f32.gmra.mrb[0].mxu0 %v81
    %v199 = vpop.f32.mrb[0].mxu0
    %v200 = vadd.f32 0.0, %v199
    %v201 = vpop.f32.mrb[0].mxu0
    %202 = vmatprep.mubr.f32.mxu0 0.0
    %203 = vmatmul.mubr.f32.gmra.mrb[0].mxu0 %v82
    %v204 = vpop.f32.mrb[0].mxu0
    %v205 = vadd.f32 0.0, %v204
    %v206 = vpop.f32.mrb[0].mxu0
    %207 = vmatprep.mubr.f32.mxu0 0.0
    %208 = vmatmul.mubr.f32.gmra.mrb[0].mxu0 %v83
    %v209 = vpop.f32.mrb[0].mxu0
    %v210 = vadd.f32 0.0, %v209
    %v211 = vpop.f32.mrb[0].mxu0
    %212 = vmatprep.mubr.f32.mxu0 0.0
    %213 = vmatmul.mubr.f32.gmra.mrb[0].mxu0 %v84
    %v214 = vpop.f32.mrb[0].mxu0
    %v215 = vadd.f32 0.0, %v214
    %v216 = vpop.f32.mrb[0].mxu0
    %217 = vmatprep.mubr.f32.mxu0 0.0
    %218 = vmatmul.mubr.f32.gmra.mrb[0].mxu0 %v85
    %v219 = vpop.f32.mrb[0].mxu0
    %v220 = vadd.f32 0.0, %v219
    %v221 = vpop.f32.mrb[0].mxu0
    %222 = vmatprep.mubr.f32.mxu0 0.0
    %223 = vmatmul.mubr.f32.gmra.mrb[0].mxu0 %v86
    %v224 = vpop.f32.mrb[0].mxu0
    %v225 = vadd.f32 0.0, %v224
    %v226 = vpop.f32.mrb[0].mxu0
    %227 = vmatprep.mubr.f32.mxu0 0.0
    %228 = vmatmul.mubr.f32.gmra.mrb[0].mxu0 %v87
    %v229 = vpop.f32.mrb[0].mxu0
    %v230 = vadd.f32 0.0, %v229
    %v231 = vpop.f32.mrb[0].mxu0
    %232 = vmatprep.mubr.f32.mxu0 0.0
    %233 = vmatmul.mubr.f32.gmra.mrb[0].mxu0 %v88
    %v234 = vpop.f32.mrb[0].mxu0
    %v235 = vadd.f32 0.0, %v234
    %v236 = vpop.f32.mrb[0].mxu0
    %237 = vmatprep.mubr.f32.mxu0 0.0
    %238 = vmatmul.mubr.f32.gmra.mrb[0].mxu0 %v89
    %v239 = vpop.f32.mrb[0].mxu0
    %v240 = vadd.f32 0.0, %v239
    %v241 = vpop.f32.mrb[0].mxu0
    %242 = vmatprep.mubr.f32.mxu0 0.0
    %243 = vmatmul.mubr.f32.gmra.mrb[0].mxu0 %v90
    %v244 = vpop.f32.mrb[0].mxu0
    %v245 = vadd.f32 0.0, %v244
    %v246 = vpop.f32.mrb[0].mxu0
    %247 = vmatprep.mubr.f32.mxu0 0.0
    %248 = vmatmul.mubr.f32.gmra.mrb[0].mxu0 %v91
    %v249 = vpop.f32.mrb[0].mxu0
    %v250 = vadd.f32 0.0, %v249
    %v251 = vpop.f32.mrb[0].mxu0
    %252 = vdwg.mxu0
    %v253 = vpack.c.bf16 %v180, %v175
    %v254 = vpack.c.bf16 %v190, %v185
    %v255 = vpack.c.bf16 %v200, %v195
    %v256 = vpack.c.bf16 %v210, %v205
    %v257 = vpack.c.bf16 %v220, %v215
    %v258 = vpack.c.bf16 %v230, %v225
    %v259 = vpack.c.bf16 %v240, %v235
    %v260 = vpack.c.bf16 %v250, %v245
    %v261 = vld [vmem:[%s3] sm:$0x1]
    %v263 = vlaneseq
    %v264 = vshrl.u32 %v263, 7
    %v265 = vsub.s32 0, %v264
    %v266 = vrot.slane %v261, %v265
    %v284 = vunpack.c.l.b16 %v60
    %v285 = vunpack.c.l.b16 %v61
    %v286 = vunpack.c.l.b16 %v62
    %v287 = vunpack.c.l.b16 %v63
    %v288 = vunpack.c.l.b16 %v64
    %v289 = vunpack.c.l.b16 %v65
    %v290 = vunpack.c.l.b16 %v66
    %v291 = vunpack.c.l.b16 %v67
    %v292 = vunpack.c.l.b16 %v68
    %v293 = vunpack.c.l.b16 %v69
    %v294 = vunpack.c.l.b16 %v70
    %v295 = vunpack.c.l.b16 %v71
    %v296 = vunpack.c.l.b16 %v72
    %v297 = vunpack.c.l.b16 %v73
    %v298 = vunpack.c.l.b16 %v74
    %v299 = vunpack.c.l.b16 %v75
    %v300 = vpack.c.b16 %v285, %v284
    %v301 = vpack.c.b16 %v287, %v286
    %v302 = vpack.c.b16 %v289, %v288
    %v303 = vpack.c.b16 %v291, %v290
    %v304 = vpack.c.b16 %v293, %v292
    %v305 = vpack.c.b16 %v295, %v294
    %v306 = vpack.c.b16 %v297, %v296
    %v307 = vpack.c.b16 %v299, %v298
    %316 = vmatprep.subr.bf16.mxu0 0
    %317 = vmatpush1.bf16.msra.mxu0 %v253
    %318 = vmatprep.subr.bf16.mxu0 0
    %319 = vmatpush1.bf16.msra.mxu0 %v254
    %320 = vmatprep.subr.bf16.mxu0 0
    %321 = vmatpush1.bf16.msra.mxu0 %v255
    %322 = vmatprep.subr.bf16.mxu0 0
    %323 = vmatpush1.bf16.msra.mxu0 %v256
    %324 = vmatprep.subr.bf16.mxu0 0
    %325 = vmatpush1.bf16.msra.mxu0 %v257
    %326 = vmatprep.subr.bf16.mxu0 0
    %327 = vmatpush1.bf16.msra.mxu0 %v258
    %328 = vmatprep.subr.bf16.mxu0 0
    %329 = vmatpush1.bf16.msra.mxu0 %v259
    %330 = vmatprep.subr.bf16.mxu0 0
    %331 = vmatpush1.bf16.msra.mxu0 %v260
    %332 = vmatprep.subr.bf16.mxu0 0
    %333 = vmatpush1.bf16.msra.mxu0 0
    %334 = vmatprep.subr.bf16.mxu0 0
    %335 = vmatpush1.bf16.msra.mxu0 0
    %336 = vmatprep.subr.bf16.mxu0 0
    %337 = vmatpush1.bf16.msra.mxu0 0
    %338 = vmatprep.subr.bf16.mxu0 0
    %339 = vmatpush1.bf16.msra.mxu0 0
    %340 = vmatprep.subr.bf16.mxu0 0
    %341 = vmatpush1.bf16.msra.mxu0 0
    %342 = vmatprep.subr.bf16.mxu0 0
    %343 = vmatpush1.bf16.msra.mxu0 0
    %344 = vmatprep.subr.bf16.mxu0 0
    %345 = vmatpush1.bf16.msra.mxu0 0
    %346 = vmatprep.subr.bf16.mxu0 0
    %347 = vmatpush1.bf16.msra.mxu0 0
    %348 = vmatprep.mubr.bf16.mxu0 0
    %349 = vmatmul.mubr.bf16.gmra.mrb[0].mxu0 %v300
    %v350 = vpop.f32.mrb[0].mxu0
    %v351 = vadd.f32 %v266, %v350
    %v352 = vpop.f32.mrb[0].mxu0
    %v353 = vpop.f32.mrb[0].mxu0
    %v354 = vadd.f32 %v266, %v353
    %v355 = vpop.f32.mrb[0].mxu0
    %356 = vmatprep.mubr.bf16.mxu0 0
    %357 = vmatmul.mubr.bf16.gmra.mrb[0].mxu0 %v301
    %v358 = vpop.f32.mrb[0].mxu0
    %v359 = vadd.f32 %v266, %v358
    %v360 = vpop.f32.mrb[0].mxu0
    %v361 = vpop.f32.mrb[0].mxu0
    %v362 = vadd.f32 %v266, %v361
    %v363 = vpop.f32.mrb[0].mxu0
    %364 = vmatprep.mubr.bf16.mxu0 0
    %365 = vmatmul.mubr.bf16.gmra.mrb[0].mxu0 %v302
    %v366 = vpop.f32.mrb[0].mxu0
    %v367 = vadd.f32 %v266, %v366
    %v368 = vpop.f32.mrb[0].mxu0
    %v369 = vpop.f32.mrb[0].mxu0
    %v370 = vadd.f32 %v266, %v369
    %v371 = vpop.f32.mrb[0].mxu0
    %372 = vmatprep.mubr.bf16.mxu0 0
    %373 = vmatmul.mubr.bf16.gmra.mrb[0].mxu0 %v303
    %v374 = vpop.f32.mrb[0].mxu0
    %v375 = vadd.f32 %v266, %v374
    %v376 = vpop.f32.mrb[0].mxu0
    %v377 = vpop.f32.mrb[0].mxu0
    %v378 = vadd.f32 %v266, %v377
    %v379 = vpop.f32.mrb[0].mxu0
    %380 = vmatprep.mubr.bf16.mxu0 0
    %381 = vmatmul.mubr.bf16.gmra.mrb[0].mxu0 %v304
    %v382 = vpop.f32.mrb[0].mxu0
    %v383 = vadd.f32 %v266, %v382
    %v384 = vpop.f32.mrb[0].mxu0
    %v385 = vpop.f32.mrb[0].mxu0
    %v386 = vadd.f32 %v266, %v385
    %v387 = vpop.f32.mrb[0].mxu0
    %388 = vmatprep.mubr.bf16.mxu0 0
    %389 = vmatmul.mubr.bf16.gmra.mrb[0].mxu0 %v305
    %v390 = vpop.f32.mrb[0].mxu0
    %v391 = vadd.f32 %v266, %v390
    %v392 = vpop.f32.mrb[0].mxu0
    %v393 = vpop.f32.mrb[0].mxu0
    %v394 = vadd.f32 %v266, %v393
    %v395 = vpop.f32.mrb[0].mxu0
    %396 = vmatprep.mubr.bf16.mxu0 0
    %397 = vmatmul.mubr.bf16.gmra.mrb[0].mxu0 %v306
    %v398 = vpop.f32.mrb[0].mxu0
    %v399 = vadd.f32 %v266, %v398
    %v400 = vpop.f32.mrb[0].mxu0
    %v401 = vpop.f32.mrb[0].mxu0
    %v402 = vadd.f32 %v266, %v401
    %v403 = vpop.f32.mrb[0].mxu0
    %404 = vmatprep.mubr.bf16.mxu0 0
    %405 = vmatmul.mubr.bf16.gmra.mrb[0].mxu0 %v307
    %v406 = vpop.f32.mrb[0].mxu0
    %v407 = vadd.f32 %v266, %v406
    %v408 = vpop.f32.mrb[0].mxu0
    %v409 = vpop.f32.mrb[0].mxu0
    %v410 = vadd.f32 %v266, %v409
    %v411 = vpop.f32.mrb[0].mxu0
    %412 = vdwg.mxu0
    %v413 = vmax.f32 %v351, 0.0
    %v414 = vmax.f32 %v354, 0.0
    %v415 = vmax.f32 %v359, 0.0
    %v416 = vmax.f32 %v362, 0.0
    %v417 = vmax.f32 %v367, 0.0
    %v418 = vmax.f32 %v370, 0.0
    %v419 = vmax.f32 %v375, 0.0
    %v420 = vmax.f32 %v378, 0.0
    %v421 = vmax.f32 %v383, 0.0
    %v422 = vmax.f32 %v386, 0.0
    %v423 = vmax.f32 %v391, 0.0
    %v424 = vmax.f32 %v394, 0.0
    %v425 = vmax.f32 %v399, 0.0
    %v426 = vmax.f32 %v402, 0.0
    %v427 = vmax.f32 %v407, 0.0
    %v428 = vmax.f32 %v410, 0.0
    %s429 = scalar_lea.vmem [#allocation7], 128
    %v430 = vld [vmem:[%s429] sm:$0xff]
    %v431 = vld [vmem:[%s429 + $0x8] sm:$0xff]
    %v432 = vld [vmem:[%s429 + $0x10] sm:$0xff]
    %v433 = vld [vmem:[%s429 + $0x18] sm:$0xff]
    %v434 = vld [vmem:[%s429 + $0x20] sm:$0xff]
    %v435 = vld [vmem:[%s429 + $0x28] sm:$0xff]
    %v436 = vld [vmem:[%s429 + $0x30] sm:$0xff]
    %v437 = vld [vmem:[%s429 + $0x38] sm:$0xff]
    %v438 = vld [vmem:[%s429 + $0x40] sm:$0xff]
    %v439 = vld [vmem:[%s429 + $0x48] sm:$0xff]
    %v440 = vld [vmem:[%s429 + $0x50] sm:$0xff]
    %v441 = vld [vmem:[%s429 + $0x58] sm:$0xff]
    %v442 = vld [vmem:[%s429 + $0x60] sm:$0xff]
    %v443 = vld [vmem:[%s429 + $0x68] sm:$0xff]
    %v444 = vld [vmem:[%s429 + $0x70] sm:$0xff]
    %v445 = vld [vmem:[%s429 + $0x78] sm:$0xff]
    %446 = vmatprep.subr.mxu0 0.0
    %447 = vmatpush1.msra.mxu0 %v430
    %448 = vmatprep.subr.mxu0 0.0
    %449 = vmatpush1.msra.mxu0 %v431
    %450 = vmatprep.subr.mxu0 0.0
    %451 = vmatpush1.msra.mxu0 %v432
    %452 = vmatprep.subr.mxu0 0.0
    %453 = vmatpush1.msra.mxu0 %v433
    %454 = vmatprep.subr.mxu0 0.0
    %455 = vmatpush1.msra.mxu0 %v434
    %456 = vmatprep.subr.mxu0 0.0
    %457 = vmatpush1.msra.mxu0 %v435
    %458 = vmatprep.subr.mxu0 0.0
    %459 = vmatpush1.msra.mxu0 %v436
    %460 = vmatprep.subr.mxu0 0.0
    %461 = vmatpush1.msra.mxu0 %v437
    %462 = vmatprep.subr.mxu0 0.0
    %463 = vmatpush1.msra.mxu0 %v438
    %464 = vmatprep.subr.mxu0 0.0
    %465 = vmatpush1.msra.mxu0 %v439
    %466 = vmatprep.subr.mxu0 0.0
    %467 = vmatpush1.msra.mxu0 %v440
    %468 = vmatprep.subr.mxu0 0.0
    %469 = vmatpush1.msra.mxu0 %v441
    %470 = vmatprep.subr.mxu0 0.0
    %471 = vmatpush1.msra.mxu0 %v442
    %472 = vmatprep.subr.mxu0 0.0
    %473 = vmatpush1.msra.mxu0 %v443
    %474 = vmatprep.subr.mxu0 0.0
    %475 = vmatpush1.msra.mxu0 %v444
    %476 = vmatprep.subr.mxu0 0.0
    %477 = vmatpush1.msra.mxu0 %v445
    %478 = vmatprep.subr.mxu0 0.0
    %479 = vmatpush1.msra.mxu0 0.0
    %480 = vmatprep.subr.mxu0 0.0
    %481 = vmatpush1.msra.mxu0 0.0
    %482 = vmatprep.subr.mxu0 0.0
    %483 = vmatpush1.msra.mxu0 0.0
    %484 = vmatprep.subr.mxu0 0.0
    %485 = vmatpush1.msra.mxu0 0.0
    %486 = vmatprep.subr.mxu0 0.0
    %487 = vmatpush1.msra.mxu0 0.0
    %488 = vmatprep.subr.mxu0 0.0
    %489 = vmatpush1.msra.mxu0 0.0
    %490 = vmatprep.subr.mxu0 0.0
    %491 = vmatpush1.msra.mxu0 0.0
    %492 = vmatprep.subr.mxu0 0.0
    %493 = vmatpush1.msra.mxu0 0.0
    %494 = vmatprep.subr.mxu0 0.0
    %495 = vmatpush1.msra.mxu0 0.0
    %496 = vmatprep.subr.mxu0 0.0
    %497 = vmatpush1.msra.mxu0 0.0
    %498 = vmatprep.subr.mxu0 0.0
    %499 = vmatpush1.msra.mxu0 0.0
    %500 = vmatprep.subr.mxu0 0.0
    %501 = vmatpush1.msra.mxu0 0.0
    %502 = vmatprep.subr.mxu0 0.0
    %503 = vmatpush1.msra.mxu0 0.0
    %504 = vmatprep.subr.mxu0 0.0
    %505 = vmatpush1.msra.mxu0 0.0
    %506 = vmatprep.subr.mxu0 0.0
    %507 = vmatpush1.msra.mxu0 0.0
    %508 = vmatprep.subr.mxu0 0.0
    %509 = vmatpush1.msra.mxu0 0.0
    %510 = vmatprep.mubr.f32.mxu0 0.0
    %511 = vmatmul.mubr.f32.gmra.mrb[0].mxu0 %v413
    %v512 = vpop.f32.mrb[0].mxu0
    %v513 = vadd.f32 0.0, %v512
    %v514 = vpop.f32.mrb[0].mxu0
    %515 = vmatprep.mubr.f32.mxu0 0.0
    %516 = vmatmul.mubr.f32.gmra.mrb[0].mxu0 %v414
    %v517 = vpop.f32.mrb[0].mxu0
    %v518 = vadd.f32 0.0, %v517
    %v519 = vpop.f32.mrb[0].mxu0
    %520 = vmatprep.mubr.f32.mxu0 0.0
    %521 = vmatmul.mubr.f32.gmra.mrb[0].mxu0 %v415
    %v522 = vpop.f32.mrb[0].mxu0
    %v523 = vadd.f32 0.0, %v522
    %v524 = vpop.f32.mrb[0].mxu0
    %525 = vmatprep.mubr.f32.mxu0 0.0
    %526 = vmatmul.mubr.f32.gmra.mrb[0].mxu0 %v416
    %v527 = vpop.f32.mrb[0].mxu0
    %v528 = vadd.f32 0.0, %v527
    %v529 = vpop.f32.mrb[0].mxu0
    %530 = vmatprep.mubr.f32.mxu0 0.0
    %531 = vmatmul.mubr.f32.gmra.mrb[0].mxu0 %v417
    %v532 = vpop.f32.mrb[0].mxu0
    %v533 = vadd.f32 0.0, %v532
    %v534 = vpop.f32.mrb[0].mxu0
    %535 = vmatprep.mubr.f32.mxu0 0.0
    %536 = vmatmul.mubr.f32.gmra.mrb[0].mxu0 %v418
    %v537 = vpop.f32.mrb[0].mxu0
    %v538 = vadd.f32 0.0, %v537
    %v539 = vpop.f32.mrb[0].mxu0
    %540 = vmatprep.mubr.f32.mxu0 0.0
    %541 = vmatmul.mubr.f32.gmra.mrb[0].mxu0 %v419
    %v542 = vpop.f32.mrb[0].mxu0
    %v543 = vadd.f32 0.0, %v542
    %v544 = vpop.f32.mrb[0].mxu0
    %545 = vmatprep.mubr.f32.mxu0 0.0
    %546 = vmatmul.mubr.f32.gmra.mrb[0].mxu0 %v420
    %v547 = vpop.f32.mrb[0].mxu0
    %v548 = vadd.f32 0.0, %v547
    %v549 = vpop.f32.mrb[0].mxu0
    %550 = vmatprep.mubr.f32.mxu0 0.0
    %551 = vmatmul.mubr.f32.gmra.mrb[0].mxu0 %v421
    %v552 = vpop.f32.mrb[0].mxu0
    %v553 = vadd.f32 0.0, %v552
    %v554 = vpop.f32.mrb[0].mxu0
    %555 = vmatprep.mubr.f32.mxu0 0.0
    %556 = vmatmul.mubr.f32.gmra.mrb[0].mxu0 %v422
    %v557 = vpop.f32.mrb[0].mxu0
    %v558 = vadd.f32 0.0, %v557
    %v559 = vpop.f32.mrb[0].mxu0
    %560 = vmatprep.mubr.f32.mxu0 0.0
    %561 = vmatmul.mubr.f32.gmra.mrb[0].mxu0 %v423
    %v562 = vpop.f32.mrb[0].mxu0
    %v563 = vadd.f32 0.0, %v562
    %v564 = vpop.f32.mrb[0].mxu0
    %565 = vmatprep.mubr.f32.mxu0 0.0
    %566 = vmatmul.mubr.f32.gmra.mrb[0].mxu0 %v424
    %v567 = vpop.f32.mrb[0].mxu0
    %v568 = vadd.f32 0.0, %v567
    %v569 = vpop.f32.mrb[0].mxu0
    %570 = vmatprep.mubr.f32.mxu0 0.0
    %571 = vmatmul.mubr.f32.gmra.mrb[0].mxu0 %v425
    %v572 = vpop.f32.mrb[0].mxu0
    %v573 = vadd.f32 0.0, %v572
    %v574 = vpop.f32.mrb[0].mxu0
    %575 = vmatprep.mubr.f32.mxu0 0.0
    %576 = vmatmul.mubr.f32.gmra.mrb[0].mxu0 %v426
    %v577 = vpop.f32.mrb[0].mxu0
    %v578 = vadd.f32 0.0, %v577
    %v579 = vpop.f32.mrb[0].mxu0
    %580 = vmatprep.mubr.f32.mxu0 0.0
    %581 = vmatmul.mubr.f32.gmra.mrb[0].mxu0 %v427
    %v582 = vpop.f32.mrb[0].mxu0
    %v583 = vadd.f32 0.0, %v582
    %v584 = vpop.f32.mrb[0].mxu0
    %585 = vmatprep.mubr.f32.mxu0 0.0
    %586 = vmatmul.mubr.f32.gmra.mrb[0].mxu0 %v428
    %v587 = vpop.f32.mrb[0].mxu0
    %v588 = vadd.f32 0.0, %v587
    %v589 = vpop.f32.mrb[0].mxu0
    %590 = vdwg.mxu0
    %v591 = vpack.c.bf16 %v518, %v513
    %v592 = vpack.c.bf16 %v528, %v523
    %v593 = vpack.c.bf16 %v538, %v533
    %v594 = vpack.c.bf16 %v548, %v543
    %v595 = vpack.c.bf16 %v558, %v553
    %v596 = vpack.c.bf16 %v568, %v563
    %v597 = vpack.c.bf16 %v578, %v573
    %v598 = vpack.c.bf16 %v588, %v583
    %s599 = scalar_lea.vmem %s3, 1
    %v600 = vld [vmem:[%s599] sm:$0x1]
    %v602 = vlaneseq
    %v603 = vshrl.u32 %v602, 7
    %v604 = vsub.s32 0, %v603
    %v605 = vrot.slane %v600, %v604
    %607 = vmatprep.subr.bf16.mxu0 0
    %608 = vmatpush1.bf16.msra.mxu0 %v591
    %609 = vmatprep.subr.bf16.mxu0 0
    %610 = vmatpush1.bf16.msra.mxu0 %v592
    %611 = vmatprep.subr.bf16.mxu0 0
    %612 = vmatpush1.bf16.msra.mxu0 %v593
    %613 = vmatprep.subr.bf16.mxu0 0
    %614 = vmatpush1.bf16.msra.mxu0 %v594
    %615 = vmatprep.subr.bf16.mxu0 0
    %616 = vmatpush1.bf16.msra.mxu0 %v595
    %617 = vmatprep.subr.bf16.mxu0 0
    %618 = vmatpush1.bf16.msra.mxu0 %v596
    %619 = vmatprep.subr.bf16.mxu0 0
    %620 = vmatpush1.bf16.msra.mxu0 %v597
    %621 = vmatprep.subr.bf16.mxu0 0
    %622 = vmatpush1.bf16.msra.mxu0 %v598
    %623 = vmatprep.subr.bf16.mxu0 0
    %624 = vmatpush1.bf16.msra.mxu0 0
    %625 = vmatprep.subr.bf16.mxu0 0
    %626 = vmatpush1.bf16.msra.mxu0 0
    %627 = vmatprep.subr.bf16.mxu0 0
    %628 = vmatpush1.bf16.msra.mxu0 0
    %629 = vmatprep.subr.bf16.mxu0 0
    %630 = vmatpush1.bf16.msra.mxu0 0
    %631 = vmatprep.subr.bf16.mxu0 0
    %632 = vmatpush1.bf16.msra.mxu0 0
    %633 = vmatprep.subr.bf16.mxu0 0
    %634 = vmatpush1.bf16.msra.mxu0 0
    %635 = vmatprep.subr.bf16.mxu0 0
    %636 = vmatpush1.bf16.msra.mxu0 0
    %637 = vmatprep.subr.bf16.mxu0 0
    %638 = vmatpush1.bf16.msra.mxu0 0
    %639 = vmatprep.mubr.bf16.mxu0 0
    %640 = vmatmul.mubr.bf16.gmra.mrb[0].mxu0 %v300
    %v641 = vpop.f32.mrb[0].mxu0
    %v642 = vadd.f32 %v605, %v641
    %v643 = vpop.f32.mrb[0].mxu0
    %v644 = vpop.f32.mrb[0].mxu0
    %v645 = vadd.f32 %v605, %v644
    %v646 = vpop.f32.mrb[0].mxu0
    %647 = vmatprep.mubr.bf16.mxu0 0
    %648 = vmatmul.mubr.bf16.gmra.mrb[0].mxu0 %v301
    %v649 = vpop.f32.mrb[0].mxu0
    %v650 = vadd.f32 %v605, %v649
    %v651 = vpop.f32.mrb[0].mxu0
    %v652 = vpop.f32.mrb[0].mxu0
    %v653 = vadd.f32 %v605, %v652
    %v654 = vpop.f32.mrb[0].mxu0
    %655 = vmatprep.mubr.bf16.mxu0 0
    %656 = vmatmul.mubr.bf16.gmra.mrb[0].mxu0 %v302
    %v657 = vpop.f32.mrb[0].mxu0
    %v658 = vadd.f32 %v605, %v657
    %v659 = vpop.f32.mrb[0].mxu0
    %v660 = vpop.f32.mrb[0].mxu0
    %v661 = vadd.f32 %v605, %v660
    %v662 = vpop.f32.mrb[0].mxu0
    %663 = vmatprep.mubr.bf16.mxu0 0
    %664 = vmatmul.mubr.bf16.gmra.mrb[0].mxu0 %v303
    %v665 = vpop.f32.mrb[0].mxu0
    %v666 = vadd.f32 %v605, %v665
    %v667 = vpop.f32.mrb[0].mxu0
    %v668 = vpop.f32.mrb[0].mxu0
    %v669 = vadd.f32 %v605, %v668
    %v670 = vpop.f32.mrb[0].mxu0
    %671 = vmatprep.mubr.bf16.mxu0 0
    %672 = vmatmul.mubr.bf16.gmra.mrb[0].mxu0 %v304
    %v673 = vpop.f32.mrb[0].mxu0
    %v674 = vadd.f32 %v605, %v673
    %v675 = vpop.f32.mrb[0].mxu0
    %v676 = vpop.f32.mrb[0].mxu0
    %v677 = vadd.f32 %v605, %v676
    %v678 = vpop.f32.mrb[0].mxu0
    %679 = vmatprep.mubr.bf16.mxu0 0
    %680 = vmatmul.mubr.bf16.gmra.mrb[0].mxu0 %v305
    %v681 = vpop.f32.mrb[0].mxu0
    %v682 = vadd.f32 %v605, %v681
    %v683 = vpop.f32.mrb[0].mxu0
    %v684 = vpop.f32.mrb[0].mxu0
    %v685 = vadd.f32 %v605, %v684
    %v686 = vpop.f32.mrb[0].mxu0
    %687 = vmatprep.mubr.bf16.mxu0 0
    %688 = vmatmul.mubr.bf16.gmra.mrb[0].mxu0 %v306
    %v689 = vpop.f32.mrb[0].mxu0
    %v690 = vadd.f32 %v605, %v689
    %v691 = vpop.f32.mrb[0].mxu0
    %v692 = vpop.f32.mrb[0].mxu0
    %v693 = vadd.f32 %v605, %v692
    %v694 = vpop.f32.mrb[0].mxu0
    %695 = vmatprep.mubr.bf16.mxu0 0
    %696 = vmatmul.mubr.bf16.gmra.mrb[0].mxu0 %v307
    %v697 = vpop.f32.mrb[0].mxu0
    %v698 = vadd.f32 %v605, %v697
    %v699 = vpop.f32.mrb[0].mxu0
    %v700 = vpop.f32.mrb[0].mxu0
    %v701 = vadd.f32 %v605, %v700
    %v702 = vpop.f32.mrb[0].mxu0
    %703 = vdwg.mxu0
    %v704 = vmax.f32 %v642, 0.0
    %v705 = vmax.f32 %v645, 0.0
    %v706 = vmax.f32 %v650, 0.0
    %v707 = vmax.f32 %v653, 0.0
    %v708 = vmax.f32 %v658, 0.0
    %v709 = vmax.f32 %v661, 0.0
    %v710 = vmax.f32 %v666, 0.0
    %v711 = vmax.f32 %v669, 0.0
    %v712 = vmax.f32 %v674, 0.0
    %v713 = vmax.f32 %v677, 0.0
    %v714 = vmax.f32 %v682, 0.0
    %v715 = vmax.f32 %v685, 0.0
    %v716 = vmax.f32 %v690, 0.0
    %v717 = vmax.f32 %v693, 0.0
    %v718 = vmax.f32 %v698, 0.0
    %v719 = vmax.f32 %v701, 0.0
    %s720 = scalar_lea.vmem [#allocation7], 256
    %v721 = vld [vmem:[%s720] sm:$0xff]
    %v722 = vld [vmem:[%s720 + $0x8] sm:$0xff]
    %v723 = vld [vmem:[%s720 + $0x10] sm:$0xff]
    %v724 = vld [vmem:[%s720 + $0x18] sm:$0xff]
    %v725 = vld [vmem:[%s720 + $0x20] sm:$0xff]
    %v726 = vld [vmem:[%s720 + $0x28] sm:$0xff]
    %v727 = vld [vmem:[%s720 + $0x30] sm:$0xff]
    %v728 = vld [vmem:[%s720 + $0x38] sm:$0xff]
    %v729 = vld [vmem:[%s720 + $0x40] sm:$0xff]
    %v730 = vld [vmem:[%s720 + $0x48] sm:$0xff]
    %v731 = vld [vmem:[%s720 + $0x50] sm:$0xff]
    %v732 = vld [vmem:[%s720 + $0x58] sm:$0xff]
    %v733 = vld [vmem:[%s720 + $0x60] sm:$0xff]
    %v734 = vld [vmem:[%s720 + $0x68] sm:$0xff]
    %v735 = vld [vmem:[%s720 + $0x70] sm:$0xff]
    %v736 = vld [vmem:[%s720 + $0x78] sm:$0xff]
    %737 = vmatprep.subr.mxu0 0.0
    %738 = vmatpush1.msra.mxu0 %v721
    %739 = vmatprep.subr.mxu0 0.0
    %740 = vmatpush1.msra.mxu0 %v722
    %741 = vmatprep.subr.mxu0 0.0
    %742 = vmatpush1.msra.mxu0 %v723
    %743 = vmatprep.subr.mxu0 0.0
    %744 = vmatpush1.msra.mxu0 %v724
    %745 = vmatprep.subr.mxu0 0.0
    %746 = vmatpush1.msra.mxu0 %v725
    %747 = vmatprep.subr.mxu0 0.0
    %748 = vmatpush1.msra.mxu0 %v726
    %749 = vmatprep.subr.mxu0 0.0
    %750 = vmatpush1.msra.mxu0 %v727
    %751 = vmatprep.subr.mxu0 0.0
    %752 = vmatpush1.msra.mxu0 %v728
    %753 = vmatprep.subr.mxu0 0.0
    %754 = vmatpush1.msra.mxu0 %v729
    %755 = vmatprep.subr.mxu0 0.0
    %756 = vmatpush1.msra.mxu0 %v730
    %757 = vmatprep.subr.mxu0 0.0
    %758 = vmatpush1.msra.mxu0 %v731
    %759 = vmatprep.subr.mxu0 0.0
    %760 = vmatpush1.msra.mxu0 %v732
    %761 = vmatprep.subr.mxu0 0.0
    %762 = vmatpush1.msra.mxu0 %v733
    %763 = vmatprep.subr.mxu0 0.0
    %764 = vmatpush1.msra.mxu0 %v734
    %765 = vmatprep.subr.mxu0 0.0
    %766 = vmatpush1.msra.mxu0 %v735
    %767 = vmatprep.subr.mxu0 0.0
    %768 = vmatpush1.msra.mxu0 %v736
    %769 = vmatprep.subr.mxu0 0.0
    %770 = vmatpush1.msra.mxu0 0.0
    %771 = vmatprep.subr.mxu0 0.0
    %772 = vmatpush1.msra.mxu0 0.0
    %773 = vmatprep.subr.mxu0 0.0
    %774 = vmatpush1.msra.mxu0 0.0
    %775 = vmatprep.subr.mxu0 0.0
    %776 = vmatpush1.msra.mxu0 0.0
    %777 = vmatprep.subr.mxu0 0.0
    %778 = vmatpush1.msra.mxu0 0.0
    %779 = vmatprep.subr.mxu0 0.0
    %780 = vmatpush1.msra.mxu0 0.0
    %781 = vmatprep.subr.mxu0 0.0
    %782 = vmatpush1.msra.mxu0 0.0
    %783 = vmatprep.subr.mxu0 0.0
    %784 = vmatpush1.msra.mxu0 0.0
    %785 = vmatprep.subr.mxu0 0.0
    %786 = vmatpush1.msra.mxu0 0.0
    %787 = vmatprep.subr.mxu0 0.0
    %788 = vmatpush1.msra.mxu0 0.0
    %789 = vmatprep.subr.mxu0 0.0
    %790 = vmatpush1.msra.mxu0 0.0
    %791 = vmatprep.subr.mxu0 0.0
    %792 = vmatpush1.msra.mxu0 0.0
    %793 = vmatprep.subr.mxu0 0.0
    %794 = vmatpush1.msra.mxu0 0.0
    %795 = vmatprep.subr.mxu0 0.0
    %796 = vmatpush1.msra.mxu0 0.0
    %797 = vmatprep.subr.mxu0 0.0
    %798 = vmatpush1.msra.mxu0 0.0
    %799 = vmatprep.subr.mxu0 0.0
    %800 = vmatpush1.msra.mxu0 0.0
    %801 = vmatprep.mubr.f32.mxu0 0.0
    %802 = vmatmul.mubr.f32.gmra.mrb[0].mxu0 %v704
    %v803 = vpop.f32.mrb[0].mxu0
    %v804 = vadd.f32 0.0, %v803
    %v805 = vpop.f32.mrb[0].mxu0
    %806 = vmatprep.mubr.f32.mxu0 0.0
    %807 = vmatmul.mubr.f32.gmra.mrb[0].mxu0 %v705
    %v808 = vpop.f32.mrb[0].mxu0
    %v809 = vadd.f32 0.0, %v808
    %v810 = vpop.f32.mrb[0].mxu0
    %811 = vmatprep.mubr.f32.mxu0 0.0
    %812 = vmatmul.mubr.f32.gmra.mrb[0].mxu0 %v706
    %v813 = vpop.f32.mrb[0].mxu0
    %v814 = vadd.f32 0.0, %v813
    %v815 = vpop.f32.mrb[0].mxu0
    %816 = vmatprep.mubr.f32.mxu0 0.0
    %817 = vmatmul.mubr.f32.gmra.mrb[0].mxu0 %v707
    %v818 = vpop.f32.mrb[0].mxu0
    %v819 = vadd.f32 0.0, %v818
    %v820 = vpop.f32.mrb[0].mxu0
    %821 = vmatprep.mubr.f32.mxu0 0.0
    %822 = vmatmul.mubr.f32.gmra.mrb[0].mxu0 %v708
    %v823 = vpop.f32.mrb[0].mxu0
    %v824 = vadd.f32 0.0, %v823
    %v825 = vpop.f32.mrb[0].mxu0
    %826 = vmatprep.mubr.f32.mxu0 0.0
    %827 = vmatmul.mubr.f32.gmra.mrb[0].mxu0 %v709
    %v828 = vpop.f32.mrb[0].mxu0
    %v829 = vadd.f32 0.0, %v828
    %v830 = vpop.f32.mrb[0].mxu0
    %831 = vmatprep.mubr.f32.mxu0 0.0
    %832 = vmatmul.mubr.f32.gmra.mrb[0].mxu0 %v710
    %v833 = vpop.f32.mrb[0].mxu0
    %v834 = vadd.f32 0.0, %v833
    %v835 = vpop.f32.mrb[0].mxu0
    %836 = vmatprep.mubr.f32.mxu0 0.0
    %837 = vmatmul.mubr.f32.gmra.mrb[0].mxu0 %v711
    %v838 = vpop.f32.mrb[0].mxu0
    %v839 = vadd.f32 0.0, %v838
    %v840 = vpop.f32.mrb[0].mxu0
    %841 = vmatprep.mubr.f32.mxu0 0.0
    %842 = vmatmul.mubr.f32.gmra.mrb[0].mxu0 %v712
    %v843 = vpop.f32.mrb[0].mxu0
    %v844 = vadd.f32 0.0, %v843
    %v845 = vpop.f32.mrb[0].mxu0
    %846 = vmatprep.mubr.f32.mxu0 0.0
    %847 = vmatmul.mubr.f32.gmra.mrb[0].mxu0 %v713
    %v848 = vpop.f32.mrb[0].mxu0
    %v849 = vadd.f32 0.0, %v848
    %v850 = vpop.f32.mrb[0].mxu0
    %851 = vmatprep.mubr.f32.mxu0 0.0
    %852 = vmatmul.mubr.f32.gmra.mrb[0].mxu0 %v714
    %v853 = vpop.f32.mrb[0].mxu0
    %v854 = vadd.f32 0.0, %v853
    %v855 = vpop.f32.mrb[0].mxu0
    %856 = vmatprep.mubr.f32.mxu0 0.0
    %857 = vmatmul.mubr.f32.gmra.mrb[0].mxu0 %v715
    %v858 = vpop.f32.mrb[0].mxu0
    %v859 = vadd.f32 0.0, %v858
    %v860 = vpop.f32.mrb[0].mxu0
    %861 = vmatprep.mubr.f32.mxu0 0.0
    %862 = vmatmul.mubr.f32.gmra.mrb[0].mxu0 %v716
    %v863 = vpop.f32.mrb[0].mxu0
    %v864 = vadd.f32 0.0, %v863
    %v865 = vpop.f32.mrb[0].mxu0
    %866 = vmatprep.mubr.f32.mxu0 0.0
    %867 = vmatmul.mubr.f32.gmra.mrb[0].mxu0 %v717
    %v868 = vpop.f32.mrb[0].mxu0
    %v869 = vadd.f32 0.0, %v868
    %v870 = vpop.f32.mrb[0].mxu0
    %871 = vmatprep.mubr.f32.mxu0 0.0
    %872 = vmatmul.mubr.f32.gmra.mrb[0].mxu0 %v718
    %v873 = vpop.f32.mrb[0].mxu0
    %v874 = vadd.f32 0.0, %v873
    %v875 = vpop.f32.mrb[0].mxu0
    %876 = vmatprep.mubr.f32.mxu0 0.0
    %877 = vmatmul.mubr.f32.gmra.mrb[0].mxu0 %v719
    %v878 = vpop.f32.mrb[0].mxu0
    %v879 = vadd.f32 0.0, %v878
    %v880 = vpop.f32.mrb[0].mxu0
    %881 = vdwg.mxu0
    %v882 = vpack.c.bf16 %v809, %v804
    %v883 = vpack.c.bf16 %v819, %v814
    %v884 = vpack.c.bf16 %v829, %v824
    %v885 = vpack.c.bf16 %v839, %v834
    %v886 = vpack.c.bf16 %v849, %v844
    %v887 = vpack.c.bf16 %v859, %v854
    %v888 = vpack.c.bf16 %v869, %v864
    %v889 = vpack.c.bf16 %v879, %v874
    %s890 = scalar_lea.vmem %s3, 2
    %v891 = vld [vmem:[%s890] sm:$0x1]
    %v893 = vlaneseq
    %v894 = vshrl.u32 %v893, 7
    %v895 = vsub.s32 0, %v894
    %v896 = vrot.slane %v891, %v895
    %898 = vmatprep.subr.bf16.mxu0 0
    %899 = vmatpush1.bf16.msra.mxu0 %v882
    %900 = vmatprep.subr.bf16.mxu0 0
    %901 = vmatpush1.bf16.msra.mxu0 %v883
    %902 = vmatprep.subr.bf16.mxu0 0
    %903 = vmatpush1.bf16.msra.mxu0 %v884
    %904 = vmatprep.subr.bf16.mxu0 0
    %905 = vmatpush1.bf16.msra.mxu0 %v885
    %906 = vmatprep.subr.bf16.mxu0 0
    %907 = vmatpush1.bf16.msra.mxu0 %v886
    %908 = vmatprep.subr.bf16.mxu0 0
    %909 = vmatpush1.bf16.msra.mxu0 %v887
    %910 = vmatprep.subr.bf16.mxu0 0
    %911 = vmatpush1.bf16.msra.mxu0 %v888
    %912 = vmatprep.subr.bf16.mxu0 0
    %913 = vmatpush1.bf16.msra.mxu0 %v889
    %914 = vmatprep.subr.bf16.mxu0 0
    %915 = vmatpush1.bf16.msra.mxu0 0
    %916 = vmatprep.subr.bf16.mxu0 0
    %917 = vmatpush1.bf16.msra.mxu0 0
    %918 = vmatprep.subr.bf16.mxu0 0
    %919 = vmatpush1.bf16.msra.mxu0 0
    %920 = vmatprep.subr.bf16.mxu0 0
    %921 = vmatpush1.bf16.msra.mxu0 0
    %922 = vmatprep.subr.bf16.mxu0 0
    %923 = vmatpush1.bf16.msra.mxu0 0
    %924 = vmatprep.subr.bf16.mxu0 0
    %925 = vmatpush1.bf16.msra.mxu0 0
    %926 = vmatprep.subr.bf16.mxu0 0
    %927 = vmatpush1.bf16.msra.mxu0 0
    %928 = vmatprep.subr.bf16.mxu0 0
    %929 = vmatpush1.bf16.msra.mxu0 0
    %930 = vmatprep.mubr.bf16.mxu0 0
    %931 = vmatmul.mubr.bf16.gmra.mrb[0].mxu0 %v300
    %v932 = vpop.f32.mrb[0].mxu0
    %v933 = vadd.f32 %v896, %v932
    %v934 = vpop.f32.mrb[0].mxu0
    %v935 = vpop.f32.mrb[0].mxu0
    %v936 = vadd.f32 %v896, %v935
    %v937 = vpop.f32.mrb[0].mxu0
    %938 = vmatprep.mubr.bf16.mxu0 0
    %939 = vmatmul.mubr.bf16.gmra.mrb[0].mxu0 %v301
    %v940 = vpop.f32.mrb[0].mxu0
    %v941 = vadd.f32 %v896, %v940
    %v942 = vpop.f32.mrb[0].mxu0
    %v943 = vpop.f32.mrb[0].mxu0
    %v944 = vadd.f32 %v896, %v943
    %v945 = vpop.f32.mrb[0].mxu0
    %946 = vmatprep.mubr.bf16.mxu0 0
    %947 = vmatmul.mubr.bf16.gmra.mrb[0].mxu0 %v302
    %v948 = vpop.f32.mrb[0].mxu0
    %v949 = vadd.f32 %v896, %v948
    %v950 = vpop.f32.mrb[0].mxu0
    %v951 = vpop.f32.mrb[0].mxu0
    %v952 = vadd.f32 %v896, %v951
    %v953 = vpop.f32.mrb[0].mxu0
    %954 = vmatprep.mubr.bf16.mxu0 0
    %955 = vmatmul.mubr.bf16.gmra.mrb[0].mxu0 %v303
    %v956 = vpop.f32.mrb[0].mxu0
    %v957 = vadd.f32 %v896, %v956
    %v958 = vpop.f32.mrb[0].mxu0
    %v959 = vpop.f32.mrb[0].mxu0
    %v960 = vadd.f32 %v896, %v959
    %v961 = vpop.f32.mrb[0].mxu0
    %962 = vmatprep.mubr.bf16.mxu0 0
    %963 = vmatmul.mubr.bf16.gmra.mrb[0].mxu0 %v304
    %v964 = vpop.f32.mrb[0].mxu0
    %v965 = vadd.f32 %v896, %v964
    %v966 = vpop.f32.mrb[0].mxu0
    %v967 = vpop.f32.mrb[0].mxu0
    %v968 = vadd.f32 %v896, %v967
    %v969 = vpop.f32.mrb[0].mxu0
    %970 = vmatprep.mubr.bf16.mxu0 0
    %971 = vmatmul.mubr.bf16.gmra.mrb[0].mxu0 %v305
    %v972 = vpop.f32.mrb[0].mxu0
    %v973 = vadd.f32 %v896, %v972
    %v974 = vpop.f32.mrb[0].mxu0
    %v975 = vpop.f32.mrb[0].mxu0
    %v976 = vadd.f32 %v896, %v975
    %v977 = vpop.f32.mrb[0].mxu0
    %978 = vmatprep.mubr.bf16.mxu0 0
    %979 = vmatmul.mubr.bf16.gmra.mrb[0].mxu0 %v306
    %v980 = vpop.f32.mrb[0].mxu0
    %v981 = vadd.f32 %v896, %v980
    %v982 = vpop.f32.mrb[0].mxu0
    %v983 = vpop.f32.mrb[0].mxu0
    %v984 = vadd.f32 %v896, %v983
    %v985 = vpop.f32.mrb[0].mxu0
    %986 = vmatprep.mubr.bf16.mxu0 0
    %987 = vmatmul.mubr.bf16.gmra.mrb[0].mxu0 %v307
    %v988 = vpop.f32.mrb[0].mxu0
    %v989 = vadd.f32 %v896, %v988
    %v990 = vpop.f32.mrb[0].mxu0
    %v991 = vpop.f32.mrb[0].mxu0
    %v992 = vadd.f32 %v896, %v991
    %v993 = vpop.f32.mrb[0].mxu0
    %994 = vdwg.mxu0
    %995 = vst [vmem:[#allocation8] sm:$0xff] %v933
    %996 = vst [vmem:[#allocation8 + $0x8] sm:$0xff] %v936
    %997 = vst [vmem:[#allocation8 + $0x10] sm:$0xff] %v941
    %998 = vst [vmem:[#allocation8 + $0x18] sm:$0xff] %v944
    %999 = vst [vmem:[#allocation8 + $0x20] sm:$0xff] %v949
    %1000 = vst [vmem:[#allocation8 + $0x28] sm:$0xff] %v952
    %1001 = vst [vmem:[#allocation8 + $0x30] sm:$0xff] %v957
    %1002 = vst [vmem:[#allocation8 + $0x38] sm:$0xff] %v960
    %1003 = vst [vmem:[#allocation8 + $0x40] sm:$0xff] %v965
    %1004 = vst [vmem:[#allocation8 + $0x48] sm:$0xff] %v968
    %1005 = vst [vmem:[#allocation8 + $0x50] sm:$0xff] %v973
    %1006 = vst [vmem:[#allocation8 + $0x58] sm:$0xff] %v976
    %1007 = vst [vmem:[#allocation8 + $0x60] sm:$0xff] %v981
    %1008 = vst [vmem:[#allocation8 + $0x68] sm:$0xff] %v984
    %1009 = vst [vmem:[#allocation8 + $0x70] sm:$0xff] %v989
    %1010 = vst [vmem:[#allocation8 + $0x78] sm:$0xff] %v992
    // Predicated region
    $region30: #{tpu_custom_call.1} parent=1 // pred_check
      _
    $region31: #{tpu_custom_call.1} parent=1 // pred_check_branch
      %1012 = sbr.rel (0) target = $region33
    $region32: #{tpu_custom_call.1} parent=1 // pred_region
      %s1014 = ssub.s32 2048, 2048
      %1015 = vsyncadd [#allocation4], %s1014
      %s1016 = sshll.u32 [#allocation8], 4
      %s1017 = int_to_ptr.vmem [resolvable:$true] %s1016
      %1022 = dma.vmem_to_hbm [thread:$0]  %s1017, 2048, %s4, [#allocation4], 128, 128, 8
    $region33: #{tpu_custom_call.1} parent=1 // pred_fallthru
      _
    // Predicated region
    $region34: #{tpu_custom_call.1} parent=1 // pred_check
      _
    $region35: #{tpu_custom_call.1} parent=1 // pred_check_branch
      %1024 = sbr.rel (0) target = $region37
    $region36: #{tpu_custom_call.1} parent=1 // pred_region
      %1025 = dma.done [#allocation4], 2048
    $region37: #{tpu_custom_call.1} parent=1 // pred_fallthru
      _
    %1026 = vsyncpa [#allocation3], 1
    %1027 = vsyncpa [#allocation6], 1
    %1028 = vsyncpa [#allocation4], 1

</llo_original>
